<compile_context>
chip_gen: v5e
topology: v5e:2x2
jax: 0.10.0
libtpu: 0.0.40
codegen_flags: <defaults>
</compile_context>

<pallas_src>
import functools

import jax
import jax.numpy as jnp
import numpy as np
from jax import lax
from jax.experimental import pallas as pl
from jax.experimental.pallas import tpu as pltpu


FRONTEND_CFG = [64, 64, 'M', 128, 128, 'M', 256, 256, 256, 'M', 512, 512, 512]


# -----------------------------------------------------------------------------
# Per-chip VMEM budgeting (tile height + vmem limit derived from the real chip)
# -----------------------------------------------------------------------------
@functools.lru_cache(maxsize=None)
def _vmem_capacity_bytes():
    try:
        info = pltpu.get_tpu_info()
        for name in ("vmem_capacity_bytes", "vmem_bytes", "vmem_size_bytes"):
            v = getattr(info, name, None)
            if v:
                return int(v)
    except Exception:
        pass
    return 64 << 20                    # conservative fallback (v7x per-TC VMEM)


def _vmem_limit_bytes():
    return max(32 << 20, min(int(_vmem_capacity_bytes() * 0.8), 100 << 20))


def _conv_vmem_bytes(TH, W, Cin, Cout, pool):
    """Rough per-grid-step VMEM working set of the conv kernel."""
    bf, f4 = 2, 4
    THo, Wo = (TH // 2, W // 2) if pool else (TH, W)
    x_body = 2 * TH * W * Cin * bf            # Pallas double buffer
    halos = 2 * 2 * W * Cin * bf              # two 1-row halo blocks
    wts = 2 * 9 * Cin * Cout * bf             # TODO(synk): pl.Buffered(1) -> 1x
    bias = 2 * Cout * f4
    outb = 2 * THo * Wo * Cout * bf
    xpad = (TH + 2) * (W + 2) * Cin * bf      # live col-padded slab
    lhs = TH * W * 3 * Cin * bf               # per-dw K=3*Cin im2col LHS
    acc = TH * W * Cout * f4
    return x_body + halos + wts + bias + outb + xpad + lhs + acc


def _pick_tile_h(H, W, Cin, Cout, pool, max_tile_h=None):
    """Largest row tile that divides H (even if pooled) and fits the budget."""
    budget = int(_vmem_capacity_bytes() * 0.55)
    hi = min(H, 32 if max_tile_h is None else max_tile_h)
    best = 2 if pool else 1
    for th in range(1, hi + 1):
        if H % th:
            continue
        if pool and th % 2:
            continue
        if _conv_vmem_bytes(th, W, Cin, Cout, pool) <= budget:
            best = th
    return best


# -----------------------------------------------------------------------------
# Pallas kernel: 3x3 conv (pad=1) + bias + ReLU, optional fused MaxPool2x2
# -----------------------------------------------------------------------------
def _conv3x3_relu_kernel(xt_ref, xm_ref, xb_ref, w_ref, b_ref, o_ref,
                         *, TH, W, Cin, Cout, pool):
    """One (batch, row-tile) grid step.

    xt_ref/xb_ref: (1, 1, W, Cin)  bf16 1-row halos (edge-clamped; zeroed here).
    xm_ref       : (1, TH, W, Cin) bf16 body rows.
    w_ref        : (3, 3*Cin, Cout) bf16 weights, per-dw rows ordered (dh, ci).
    b_ref        : (1, Cout)       f32 bias.
    o_ref        : (1, THo, Wo, Cout) bf16 output tile (halved if pool fused).
    """
    i = pl.program_id(1)
    last = pl.num_programs(1) - 1

    # Halo rows are edge-clamped by the index map -> zero them at the edges.
    top = xt_ref[0] * (i > 0).astype(jnp.bfloat16)           # (1, W, Cin)
    bot = xb_ref[0] * (i < last).astype(jnp.bfloat16)        # (1, W, Cin)
    rows = jnp.concatenate([top, xm_ref[0], bot], axis=0)    # (TH+2, W, Cin)

    # One column zero-pad, then one shifted slice per dw (2 sublane shifts
    # total) and three accumulated deep-K (=3*Cin) MXU dots.
    zcol = jnp.zeros((TH + 2, 1, Cin), jnp.bfloat16)
    xpad = jnp.concatenate([zcol, rows, zcol], axis=1)       # (TH+2, W+2, Cin)

    acc = jnp.zeros((TH * W, Cout), jnp.float32)
    for dw in range(3):
        x_dw = xpad[:, dw:dw + W, :]                         # (TH+2, W, Cin)
        lhs = jnp.concatenate(
            [x_dw[0:TH], x_dw[1:TH + 1], x_dw[2:TH + 2]], axis=-1)  # (TH,W,3Cin)
        acc = acc + jnp.dot(lhs.reshape(TH * W, 3 * Cin), w_ref[dw],
                            preferred_element_type=jnp.float32)

    acc = jnp.maximum(acc + b_ref[...], 0.0)                 # bias + ReLU in f32

    if pool:  # fused MaxPool2d(kernel_size=2, stride=2) epilogue
        y = acc.reshape(TH // 2, 2, W // 2, 2, Cout)
        y = jnp.max(jnp.max(y, axis=3), axis=1)
        o_ref[...] = y.reshape(1, TH // 2, W // 2, Cout).astype(o_ref.dtype)
    else:
        o_ref[...] = acc.reshape(1, TH, W, Cout).astype(o_ref.dtype)


def conv3x3_relu(x, w_hwio, b, pool, max_tile_h=None):
    """x: (N,H,W,Cin) bf16; w_hwio: (3,3,Cin,Cout) f32; b: (Cout,) f32."""
    N, H, W, Cin = x.shape
    Cout = w_hwio.shape[-1]
    if pool:
        assert H % 2 == 0 and W % 2 == 0
    TH = _pick_tile_h(H, W, Cin, Cout, pool, max_tile_h)
    Ho, Wo, THo = (H // 2, W // 2, TH // 2) if pool else (H, W, TH)

    # (3,3,Cin,Cout) -> (3 [dw], 3*Cin [dh-major, ci], Cout): matches the
    # in-kernel per-dw dh-concat order.
    w3 = jnp.transpose(w_hwio, (1, 0, 2, 3)).reshape(3, 3 * Cin, Cout)
    w3 = w3.astype(jnp.bfloat16)
    b2 = b.reshape(1, Cout).astype(jnp.float32)
    x = x.astype(jnp.bfloat16)

    kernel = functools.partial(_conv3x3_relu_kernel,
                               TH=TH, W=W, Cin=Cin, Cout=Cout, pool=pool)

    # TODO(synk): single-buffer the grid-invariant w3/b2 specs with
    # pipeline_mode=pl.Buffered(1) (saves ~4.5 MiB on 512x512 layers) once
    # buffer_count=1 is verified on the target jax version.
    # TODO(synk): lane-dense (Wo*Cout) output layout for the Cout=64 layers if
    # the masked partial-store path shows up as the store bottleneck.
    return pl.pallas_call(
        kernel,
        out_shape=jax.ShapeDtypeStruct((N, Ho, Wo, Cout), jnp.bfloat16),
        grid=(N, H // TH),
        in_specs=[
            # 1-row top/bottom halos (index clamped at the edge; kernel zeroes
            # them there).  All activation blocks are auto-pipelined by Pallas,
            # so halo + body DMAs overlap compute.
            pl.BlockSpec((1, 1, W, Cin),
                         lambda n, i: (n, jnp.maximum(i * TH - 1, 0), 0, 0)),
            pl.BlockSpec((1, TH, W, Cin), lambda n, i: (n, i, 0, 0)),
            pl.BlockSpec((1, 1, W, Cin),
                         lambda n, i: (n, jnp.minimum(i * TH + TH, H - 1), 0, 0)),
            pl.BlockSpec((3, 3 * Cin, Cout), lambda n, i: (0, 0, 0)),  # weights
            pl.BlockSpec((1, Cout), lambda n, i: (0, 0)),              # bias
        ],
        out_specs=pl.BlockSpec((1, THo, Wo, Cout), lambda n, i: (n, i, 0, 0)),
        compiler_params=pltpu.CompilerParams(
            dimension_semantics=("parallel", "parallel"),
            vmem_limit_bytes=_vmem_limit_bytes(),
        ),
    )(x, x, x, w3, b2)


# -----------------------------------------------------------------------------
# First-layer path (Cin=3): XLA im2col on the tiny input + Pallas GEMM kernel
# -----------------------------------------------------------------------------
def _gemm_bias_relu_kernel(x_ref, w_ref, b_ref, o_ref, *, TH, W, K, Cout):
    acc = jnp.dot(x_ref[0].reshape(TH * W, K), w_ref[...],
                  preferred_element_type=jnp.float32)
    acc = jnp.maximum(acc + b_ref[...], 0.0)
    o_ref[...] = acc.reshape(1, TH, W, Cout).astype(o_ref.dtype)


def conv3x3_relu_small_cin(x, w_hwio, b, max_tile_h=None):
    """3x3 conv for tiny Cin (the RGB layer): patches built in XLA, GEMM in Pallas."""
    N, H, W, Cin = x.shape
    Cout = w_hwio.shape[-1]
    K = 9 * Cin

    xp = jnp.pad(x.astype(jnp.bfloat16), ((0, 0), (1, 1), (1, 1), (0, 0)))
    patches = jnp.concatenate(
        [xp[:, dh:dh + H, dw:dw + W, :] for dh in range(3) for dw in range(3)],
        axis=-1)                                             # (N, H, W, 9*Cin)
    w2 = w_hwio.reshape(K, Cout).astype(jnp.bfloat16)        # rows: (dh, dw, ci)
    b2 = b.reshape(1, Cout).astype(jnp.float32)

    TH = _pick_tile_h(H, W, K, Cout, pool=False, max_tile_h=max_tile_h)
    kernel = functools.partial(_gemm_bias_relu_kernel, TH=TH, W=W, K=K, Cout=Cout)
    return pl.pallas_call(
        kernel,
        out_shape=jax.ShapeDtypeStruct((N, H, W, Cout), jnp.bfloat16),
        grid=(N, H // TH),
        in_specs=[
            pl.BlockSpec((1, TH, W, K), lambda n, i: (n, i, 0, 0)),
            pl.BlockSpec((K, Cout), lambda n, i: (0, 0)),
            pl.BlockSpec((1, Cout), lambda n, i: (0, 0)),
        ],
        out_specs=pl.BlockSpec((1, TH, W, Cout), lambda n, i: (n, i, 0, 0)),
        compiler_params=pltpu.CompilerParams(
            dimension_semantics=("parallel", "parallel"),
            vmem_limit_bytes=_vmem_limit_bytes(),
        ),
    )(patches, w2, b2)


def _conv_layer(x, lyr, max_tile_h=None):
    if x.shape[-1] <= 8 and not lyr['pool']:
        return conv3x3_relu_small_cin(x, lyr['w'], lyr['b'], max_tile_h)
    return conv3x3_relu(x, lyr['w'], lyr['b'], lyr['pool'], max_tile_h)


# -----------------------------------------------------------------------------
# Parameters (deterministic He-scaled init; pool recorded on preceding conv)
# -----------------------------------------------------------------------------
def init_params(key, cfg=FRONTEND_CFG, in_channels=3):
    layers = []
    c = in_channels
    for v in cfg:
        if v == 'M':
            layers[-1]['pool'] = True     # every 'M' follows a conv -> fuse
        else:
            key, wk = jax.random.split(key)
            std = (2.0 / (9 * c)) ** 0.5
            w = std * jax.random.normal(wk, (3, 3, c, v), dtype=jnp.float32)
            layers.append({'w': w, 'b': jnp.zeros((v,), jnp.float32),
                           'pool': False})
            c = v
    return layers


# -----------------------------------------------------------------------------
# Forward pass (NCHW in / NCHW out, like the PyTorch module)
# -----------------------------------------------------------------------------
def crowd_encoder_forward(x_nchw, layers, max_tile_h=None):
    x = jnp.transpose(x_nchw, (0, 2, 3, 1)).astype(jnp.bfloat16)  # NCHW -> NHWC
    for lyr in layers:
        x = _conv_layer(x, lyr, max_tile_h)
    return jnp.transpose(x, (0, 3, 1, 2)).astype(jnp.float32)     # NHWC -> NCHW


# -----------------------------------------------------------------------------
# Pure-JAX reference (bf16 operands / f32 accumulation, mirrors the kernel)
# -----------------------------------------------------------------------------
def reference_forward(x_nchw, layers):
    x = jnp.transpose(x_nchw, (0, 2, 3, 1)).astype(jnp.bfloat16)
    for lyr in layers:
        y = lax.conv_general_dilated(
            x, lyr['w'].astype(jnp.bfloat16),
            window_strides=(1, 1), padding=((1, 1), (1, 1)),
            dimension_numbers=('NHWC', 'HWIO', 'NHWC'),
            preferred_element_type=jnp.float32)
        y = jnp.maximum(y + lyr['b'], 0.0)
        if lyr['pool']:
            y = lax.reduce_window(y, -jnp.inf, lax.max,
                                  (1, 2, 2, 1), (1, 2, 2, 1), 'VALID')
        x = y.astype(jnp.bfloat16)
    return jnp.transpose(x, (0, 3, 1, 2)).astype(jnp.float32)


if __name__ == "__main__":
    key = jax.random.PRNGKey(0)
    pkey, xkey = jax.random.split(key)

    # Small deterministic input: batch=2, 3 RGB channels, 16x16 spatial (NCHW).
    x = jax.random.normal(xkey, (2, 3, 16, 16), dtype=jnp.float32)
    layers = init_params(pkey)

    # max_tile_h=4 forces multiple row tiles on the 16/8-row layers so the
    # inter-tile halo path (top-edge / interior / bottom-edge tiles) is
    # exercised at this tiny spatial size.  Production default: auto-budgeted,
    # up to 32 rows per tile (larger tiles on v5e/v6e's 128 MiB VMEM).
    out = jax.block_until_ready(crowd_encoder_forward(x, layers, max_tile_h=4))
    # 3 maxpools -> spatial /8, final channels = 512.
    assert out.shape == (2, 512, 2, 2), out.shape

    ref = jax.block_until_ready(reference_forward(x, layers))
    # bf16 MXU operands (in both paths) -> loose tolerance vs. the XLA conv.
    np.testing.assert_allclose(np.asarray(out), np.asarray(ref),
                               rtol=5e-2, atol=5e-2)

    print("KERNEL_OK")
</pallas_src>

<mosaic_0001>
module attributes {stable_mosaic.version = 11 : i64} {
  func.func @_gemm_bias_relu_kernel(%arg0: i32, %arg1: i32, %arg2: memref<1x4x16x27xbf16, #tpu.memory_space<vmem>>, %arg3: memref<27x64xbf16, #tpu.memory_space<vmem>>, %arg4: memref<1x64xf32, #tpu.memory_space<vmem>>, %arg5: memref<1x4x16x64xbf16, #tpu.memory_space<vmem>>) attributes {dimension_semantics = [#tpu.dimension_semantics<parallel>, #tpu.dimension_semantics<parallel>], iteration_bounds = array<i64: 2, 4>, scalar_prefetch = 0 : i64, scratch_operands = 0 : i64, tpu.core_type = #tpu.core_type<tc>, window_params = [{transform_indices = @transform_0, window_bounds = array<i64: 1, 4, 16, 27>}, {pipeline_mode = #tpu.pipeline_mode<synchronous>, transform_indices = @transform_1, window_bounds = array<i64: 27, 64>}, {pipeline_mode = #tpu.pipeline_mode<synchronous>, transform_indices = @transform_2, window_bounds = array<i64: 1, 64>}, {transform_indices = @transform_3, window_bounds = array<i64: 1, 4, 16, 64>}]} {
    %c0 = arith.constant 0 : index
    %c0_0 = arith.constant 0 : index
    %c0_1 = arith.constant 0 : index
    %c0_2 = arith.constant 0 : index
    %0 = vector.load %arg2[%c0, %c0_0, %c0_1, %c0_2] : memref<1x4x16x27xbf16, #tpu.memory_space<vmem>>, vector<1x4x16x27xbf16>
    %1 = vector.shape_cast %0 : vector<1x4x16x27xbf16> to vector<4x16x27xbf16>
    %2 = vector.shape_cast %1 : vector<4x16x27xbf16> to vector<64x27xbf16>
    %c0_3 = arith.constant 0 : index
    %c0_4 = arith.constant 0 : index
    %3 = vector.load %arg3[%c0_3, %c0_4] : memref<27x64xbf16, #tpu.memory_space<vmem>>, vector<27x64xbf16>
    %cst = arith.constant dense<0.000000e+00> : vector<64x64xf32>
    %4 = tpu.matmul %2, %3, %cst {dimension_numbers = #tpu.dot_dimension_numbers<[1], [0], [0], [1], [0, 0, 1, 1], [], []>} : vector<64x27xbf16>, vector<27x64xbf16>, vector<64x64xf32> -> vector<64x64xf32>
    %c0_5 = arith.constant 0 : index
    %c0_6 = arith.constant 0 : index
    %5 = vector.load %arg4[%c0_5, %c0_6] : memref<1x64xf32, #tpu.memory_space<vmem>>, vector<1x64xf32>
    %6 = vector.broadcast %5 : vector<1x64xf32> to vector<64x64xf32>
    %7 = arith.addf %4, %6 : vector<64x64xf32>
    %cst_7 = arith.constant 0.000000e+00 : f32
    %8 = vector.broadcast %cst_7 : f32 to vector<64x64xf32>
    %9 = arith.maximumf %7, %8 : vector<64x64xf32>
    %10 = vector.shape_cast %9 : vector<64x64xf32> to vector<1x4x16x64xf32>
    %11 = arith.truncf %10 : vector<1x4x16x64xf32> to vector<1x4x16x64xbf16>
    %c0_8 = arith.constant 0 : index
    %c0_9 = arith.constant 0 : index
    %c0_10 = arith.constant 0 : index
    %c0_11 = arith.constant 0 : index
    %12 = vector.load %arg5[%c0_8, %c0_9, %c0_10, %c0_11] : memref<1x4x16x64xbf16, #tpu.memory_space<vmem>>, vector<1x4x16x64xbf16>
    tpu.vector_store %arg5[%c0_8, %c0_9, %c0_10, %c0_11], %11 {strides = array<i32>} : memref<1x4x16x64xbf16, #tpu.memory_space<vmem>>, vector<1x4x16x64xbf16>,
    return
  }
  func.func @transform_0(%arg0: i32, %arg1: i32) -> (i32, i32, i32, i32) {
    %c0_i32 = arith.constant 0 : i32
    %c0_i32_0 = arith.constant 0 : i32
    %c0_i32_1 = arith.constant 0 : i32
    return %arg0, %arg1, %c0_i32, %c0_i32_0 : i32, i32, i32, i32
  }
  func.func @transform_1(%arg0: i32, %arg1: i32) -> (i32, i32) {
    %c0_i32 = arith.constant 0 : i32
    %c0_i32_0 = arith.constant 0 : i32
    %c0_i32_1 = arith.constant 0 : i32
    return %c0_i32, %c0_i32_0 : i32, i32
  }
  func.func @transform_2(%arg0: i32, %arg1: i32) -> (i32, i32) {
    %c0_i32 = arith.constant 0 : i32
    %c0_i32_0 = arith.constant 0 : i32
    %c0_i32_1 = arith.constant 0 : i32
    return %c0_i32, %c0_i32_0 : i32, i32
  }
  func.func @transform_3(%arg0: i32, %arg1: i32) -> (i32, i32, i32, i32) {
    %c0_i32 = arith.constant 0 : i32
    %c0_i32_0 = arith.constant 0 : i32
    %c0_i32_1 = arith.constant 0 : i32
    return %arg0, %arg1, %c0_i32, %c0_i32_0 : i32, i32, i32, i32
  }
}

</mosaic_0001>

<llo_original>
// kernel: tpu_custom_call.1
$region0: #{tpu_custom_call.1}
  #allocation0 [shape = 'u32[]', space=smem, size = 0x4, offset = 0x4, fixed_abs, tag = 'smem constant byte address 0x4 - core index']
  #allocation1 [shape = 'u32[72,128]{1,0:T(1,128)}', space=vmem, size = 0x9000, scoped, tag = 'internal scratch']
  %s0 = inlined_call_operand.hbm [shape: bf16[2,16,16,27], index: 0, kind: input, shape index: {}]
  %s1 = inlined_call_operand.hbm [shape: bf16[27,64], index: 1, kind: input, shape index: {}]
  %s2 = inlined_call_operand.vmem [shape: f32[1,64], index: 2, kind: input, shape index: {}]
  %s3 = inlined_call_operand.hbm [shape: bf16[2,16,16,64], index: 3, kind: output, shape index: {}]
  %s4 = sld [smem:[#allocation0]]
  $region53: #{tpu_custom_call.1} parent=0
    _
  %s6 = ssub.s32 1, %s4
  %s7 = scalar_select 0, %s6, %s4
  $region1: #{tpu_custom_call.1} parent=0
    #allocation2 [shape = 'u8[32768]{0}', space=vmem, size = 0x8000, scoped, tag = 'input window, operand 0']
    #allocation3 [shape = 's32[2]{0}', space=sflag, size = 0x8, scoped, tag = 'scoped memory for tpu_custom_call.1']
    #allocation4 [shape = 's32[2]{0}', space=sflag, size = 0x8, scoped, tag = 'scoped memory for tpu_custom_call.1']
    #allocation5 [shape = 'u8[8192]{0}', space=vmem, size = 0x2000, scoped, tag = 'input window, operand 1, single buffered']
    #allocation6 [shape = 's32[1]{0}', space=sflag, size = 0x4, scoped, tag = 'scoped memory for tpu_custom_call.1']
    #allocation7 [shape = 'u8[32768]{0}', space=vmem, size = 0x8000, scoped, tag = 'output window, operand 0']
    %8 = vsyncpa [#allocation3], 0
    %s9 = scalar_lea.sflag [#allocation3], 1
    %10 = vsyncpa %s9, 0
    %11 = vsyncpa [#allocation6], 0
    %12 = vsyncpa [#allocation4], 0
    %s13 = scalar_lea.sflag [#allocation4], 1
    %14 = vsyncpa %s13, 0
    loop: start=0, step=1, limit=10
    $region2: #{tpu_custom_call.1} parent=1 // loop_pre_header
      _
    $region3: #{tpu_custom_call.1} parent=1 // loop_header
      %s16 = sphi 0, %s20
      %p17 = scmp.ge.s32.totalorder %s16, 10
      %s23 = sphi 0, %s35
      %s24 = sphi 0, %s31
      %s25 = sphi 0, %s23
      %s26 = sphi 0, %s24
      %s27 = sphi 0, %s25
      %s28 = sphi 0, %s26
      %s40 = sphi 0, %s42
      %s43 = sphi 0, %s40
      %s44 = sphi 0, %s43
      %s60 = sphi 0, %s44
      %s64 = sphi 0, %s64
      %s66 = sphi 0, %s64
      %s67 = sphi 0, %s66
      %s81 = sphi 0, %s67
      %s85 = sphi 0, %s85
      %s87 = sphi 0, %s85
      %s88 = sphi 0, %s87
      %s102 = sphi 0, %s88
      %s110 = sphi 0, %s112
      %s113 = sphi 0, %s110
      %s114 = sphi 0, %s113
      %s130 = sphi 0, %s114
    $region4: #{tpu_custom_call.1} parent=1 // loop_header_branch
      %19 = sbr.rel (%p17) target = $region8
    $region5: #{tpu_custom_call.1} parent=1 // loop_body
      %s21 = ssub.s32 %s16, 1
      %s22 = ssub.s32 %s16, 2
      %s29 = sadd.s32 1, %s24
      %p30 = scmp.ge.s32.totalorder %s29, 4
      %s31 = scalar_select %p30, 0, %s29
      %s32 = sadd.s32 1, %s23
      %s33 = scalar_select %p30, %s32, %s23
      %p34 = scmp.ge.s32.totalorder %s33, 2
      %s35 = scalar_select %p34, 0, %s33
      %s36 = ssub.s32 %s23, %s35
      %s37 = ssub.s32 %s24, %s31
      %s38 = sor.u32 %s36, %s37
      %p39 = scmp.eq.s32.totalorder %s38, 0
      %s41 = sadd.s32 %s40, 1
      %s42 = scalar_select %p39, %s40, %s41
      %p45 = pneg %p39
      %p46 = scmp.eq.s32.totalorder %s16, 7
      %p47 = por %p45, %p46
      %p48 = scmp.ne.s32.totalorder %s40, %s43
      %p49 = scmp.eq.s32.totalorder %s16, 0
      %p50 = por %p48, %p49
      %p51 = scmp.ne.s32.totalorder %s40, %s43
      %p52 = scmp.eq.s32.totalorder %s21, 7
      %p53 = por %p51, %p52
      %p54 = scmp.ne.s32.totalorder %s43, %s44
      %p55 = scmp.eq.s32.totalorder %s21, 0
      %p56 = por %p54, %p55
      %p57 = scmp.ne.s32.totalorder %s43, %s44
      %p58 = scmp.eq.s32.totalorder %s22, 7
      %p59 = por %p57, %p58
      %p61 = scmp.ne.s32.totalorder %s44, %s60
      %p62 = scmp.eq.s32.totalorder %s22, 0
      %p63 = por %p61, %p62
      %s65 = sadd.s32 %s64, 1
      %p68 = scmp.eq.s32.totalorder %s16, 7
      %p69 = scmp.ne.s32.totalorder %s64, %s66
      %p70 = scmp.eq.s32.totalorder %s16, 0
      %p71 = por %p69, %p70
      %p72 = scmp.ne.s32.totalorder %s64, %s66
      %p73 = scmp.eq.s32.totalorder %s21, 7
      %p74 = por %p72, %p73
      %p75 = scmp.ne.s32.totalorder %s66, %s67
      %p76 = scmp.eq.s32.totalorder %s21, 0
      %p77 = por %p75, %p76
      %p78 = scmp.ne.s32.totalorder %s66, %s67
      %p79 = scmp.eq.s32.totalorder %s22, 7
      %p80 = por %p78, %p79
      %p82 = scmp.ne.s32.totalorder %s67, %s81
      %p83 = scmp.eq.s32.totalorder %s22, 0
      %p84 = por %p82, %p83
      %s86 = sadd.s32 %s85, 1
      %p89 = scmp.eq.s32.totalorder %s16, 7
      %p90 = scmp.ne.s32.totalorder %s85, %s87
      %p91 = scmp.eq.s32.totalorder %s16, 0
      %p92 = por %p90, %p91
      %p93 = scmp.ne.s32.totalorder %s85, %s87
      %p94 = scmp.eq.s32.totalorder %s21, 7
      %p95 = por %p93, %p94
      %p96 = scmp.ne.s32.totalorder %s87, %s88
      %p97 = scmp.eq.s32.totalorder %s21, 0
      %p98 = por %p96, %p97
      %p99 = scmp.ne.s32.totalorder %s87, %s88
      %p100 = scmp.eq.s32.totalorder %s22, 7
      %p101 = por %p99, %p100
      %p103 = scmp.ne.s32.totalorder %s88, %s102
      %p104 = scmp.eq.s32.totalorder %s22, 0
      %p105 = por %p103, %p104
      %s106 = ssub.s32 %s23, %s35
      %s107 = ssub.s32 %s24, %s31
      %s108 = sor.u32 %s106, %s107
      %p109 = scmp.eq.s32.totalorder %s108, 0
      %s111 = sadd.s32 %s110, 1
      %s112 = scalar_select %p109, %s110, %s111
      %p115 = pneg %p109
      %p116 = scmp.eq.s32.totalorder %s16, 7
      %p117 = por %p115, %p116
      %p118 = scmp.ne.s32.totalorder %s110, %s113
      %p119 = scmp.eq.s32.totalorder %s16, 0
      %p120 = por %p118, %p119
      %p121 = scmp.ne.s32.totalorder %s110, %s113
      %p122 = scmp.eq.s32.totalorder %s21, 7
      %p123 = por %p121, %p122
      %p124 = scmp.ne.s32.totalorder %s113, %s114
      %p125 = scmp.eq.s32.totalorder %s21, 0
      %p126 = por %p124, %p125
      %p127 = scmp.ne.s32.totalorder %s113, %s114
      %p128 = scmp.eq.s32.totalorder %s22, 7
      %p129 = por %p127, %p128
      %p131 = scmp.ne.s32.totalorder %s114, %s130
      %p132 = scmp.eq.s32.totalorder %s22, 0
      %p133 = por %p131, %p132
      %p134 = scmp.le.s32.totalorder 1, %s16
      %p135 = scmp.lt.s32.totalorder %s16, 9
      %p136 = pnand %p134, %p135
      %p137 = pneg %p136
      // Predicated region
      $region9: #{tpu_custom_call.1} parent=5 // pred_check
        _
      $region10: #{tpu_custom_call.1} parent=5 // pred_check_branch
        %139 = sbr.rel (%p136) target = $region12
      $region11: #{tpu_custom_call.1} parent=5 // pred_region
        %s140 = ssub.s32 %s16, 1
        // Predicated region
        $region13: #{tpu_custom_call.1} parent=11 // pred_check
          %p141 = pneg %p77
        $region14: #{tpu_custom_call.1} parent=11 // pred_check_branch
          %143 = sbr.rel (%p141) target = $region16
        $region15: #{tpu_custom_call.1} parent=11 // pred_region
          %145 = vsyncadd [#allocation6], 0
          %s146 = sshll.u32 %s1, 4
          %s147 = int_to_ptr.hbm [resolvable:$true] %s146
          %s148 = sshll.u32 [#allocation5], 4
          %s149 = int_to_ptr.vmem [resolvable:$true] %s148
          %154 = dma.hbm_to_vmem [thread:$0]  %s147, 256, %s149, [#allocation6], 64, 64, 4
        $region16: #{tpu_custom_call.1} parent=11 // pred_fallthru
          _
        // Predicated region
        $region17: #{tpu_custom_call.1} parent=11 // pred_check
          %p155 = pneg %p98
        $region18: #{tpu_custom_call.1} parent=11 // pred_check_branch
          %157 = sbr.rel (%p155) target = $region20
        $region19: #{tpu_custom_call.1} parent=11 // pred_region
          _
        $region20: #{tpu_custom_call.1} parent=11 // pred_fallthru
          _
      $region12: #{tpu_custom_call.1} parent=5 // pred_fallthru
        _
      %p158 = scmp.lt.s32.totalorder %s16, 8
      // Predicated region
      $region21: #{tpu_custom_call.1} parent=5 // pred_check
        %p159 = pneg %p158
      $region22: #{tpu_custom_call.1} parent=5 // pred_check_branch
        %161 = sbr.rel (%p159) target = $region24
      $region23: #{tpu_custom_call.1} parent=5 // pred_region
        // Predicated region
        $region25: #{tpu_custom_call.1} parent=23 // pred_check
          %p162 = pneg %p50
        $region26: #{tpu_custom_call.1} parent=23 // pred_check_branch
          %164 = sbr.rel (%p162) target = $region28
        $region27: #{tpu_custom_call.1} parent=23 // pred_region
          %s165 = sand.u32 %s40, 1
          %s166 = scalar_lea.sflag [#allocation3], %s165
          %s167 = sand.u32 %s40, 1
          %s168 = smul.addr %s167, 32
          %s169 = scalar_lea.vmem [#allocation2], %s168
          %s170 = smul.u32 4, %s24
          %172 = vsyncadd %s166, 0
          %s173 = smul.addr %s170, 2
          %s174 = smul.addr %s23, 32
          %s175 = sadd.s32 %s173, %s174
          %s176 = smul.addr %s175, 4
          %s177 = scalar_lea.hbm %s0, %s176
          %s178 = sshll.u32 %s177, 4
          %s179 = int_to_ptr.hbm [resolvable:$true] %s178
          %s180 = sshll.u32 %s169, 4
          %s181 = int_to_ptr.vmem [resolvable:$true] %s180
          %186 = dma.hbm_to_vmem [thread:$0]  %s179, 512, %s181, %s166, 64, 64, 4
        $region28: #{tpu_custom_call.1} parent=23 // pred_fallthru
          _
      $region24: #{tpu_custom_call.1} parent=5 // pred_fallthru
        _
      %p187 = scmp.le.s32.totalorder 1, %s16
      %p188 = scmp.lt.s32.totalorder %s16, 9
      %p189 = pnand %p187, %p188
      %p190 = pneg %p189
      // Predicated region
      $region29: #{tpu_custom_call.1} parent=5 // pred_check
        _
      $region30: #{tpu_custom_call.1} parent=5 // pred_check_branch
        %192 = sbr.rel (%p189) target = $region32
      $region31: #{tpu_custom_call.1} parent=5 // pred_region
        %s193 = ssub.s32 %s16, 1
        %s194 = sand.u32 %s43, 1
        %s195 = scalar_lea.sflag [#allocation3], %s194
        %s196 = sand.u32 %s43, 1
        %s197 = smul.addr %s196, 32
        %s198 = scalar_lea.vmem [#allocation2], %s197
        // Predicated region
        $region33: #{tpu_custom_call.1} parent=31 // pred_check
          %p199 = pneg %p56
        $region34: #{tpu_custom_call.1} parent=31 // pred_check_branch
          %201 = sbr.rel (%p199) target = $region36
        $region35: #{tpu_custom_call.1} parent=31 // pred_region
          %203 = dma.done %s195, 512
        $region36: #{tpu_custom_call.1} parent=31 // pred_fallthru
          _
        // Predicated region
        $region37: #{tpu_custom_call.1} parent=31 // pred_check
          %p204 = pneg %p77
        $region38: #{tpu_custom_call.1} parent=31 // pred_check_branch
          %206 = sbr.rel (%p204) target = $region40
        $region39: #{tpu_custom_call.1} parent=31 // pred_region
          %208 = dma.done [#allocation6], 256
        $region40: #{tpu_custom_call.1} parent=31 // pred_fallthru
          _
        %s209 = sand.u32 %s43, 1
        %s210 = scalar_lea.sflag [#allocation3], %s209
        %s211 = sand.u32 %s43, 1
        %s212 = smul.addr %s211, 32
        %s213 = scalar_lea.vmem [#allocation2], %s212
        %p214 = pneg %p56
        %p215 = pneg %p53
        %p216 = pneg %p77
        %p217 = pneg %p74
        %p218 = pneg %p98
        %p219 = pneg %p95
        %p220 = pneg %p126
        %p221 = pneg %p123
        %s222 = sand.u32 %s113, 1
        %s223 = scalar_lea.sflag [#allocation4], %s222
        %s224 = sand.u32 %s113, 1
        %s225 = smul.addr %s224, 32
        %s226 = scalar_lea.vmem [#allocation7], %s225
        %s227 = smul.u32 4, %s26
        %s228 = smul.u32 4, %s26
        %v230 = vld [vmem:[%s198] sm:$0xf]
        %v231 = vld [vmem:[%s198 + $0x4] sm:$0xf]
        %v232 = vld [vmem:[%s198 + $0x8] sm:$0xf]
        %v233 = vld [vmem:[%s198 + $0xc] sm:$0xf]
        %v234 = vld [vmem:[%s198 + $0x10] sm:$0xf]
        %v235 = vld [vmem:[%s198 + $0x14] sm:$0xf]
        %v236 = vld [vmem:[%s198 + $0x18] sm:$0xf]
        %v237 = vld [vmem:[%s198 + $0x1c] sm:$0xf]
        %v238 = vld [vmem:[#allocation5] sm:$0xf]
        %v239 = vld [vmem:[#allocation5 + $0x4] sm:$0xf]
        %v240 = vld [vmem:[#allocation5 + $0x8] sm:$0xf]
        %v241 = vld [vmem:[#allocation5 + $0xc] sm:$0x3]
        %v242 = vld [vmem:[%s2] sm:$0x1]
        %v244 = vperm.slane %v242, 0
        %v254 = vunpack.c.l.b16 %v230
        %v255 = vunpack.c.l.b16 %v231
        %v256 = vunpack.c.l.b16 %v232
        %v257 = vunpack.c.l.b16 %v233
        %v258 = vunpack.c.l.b16 %v234
        %v259 = vunpack.c.l.b16 %v235
        %v260 = vunpack.c.l.b16 %v236
        %v261 = vunpack.c.l.b16 %v237
        %v262 = vpack.c.b16 %v255, %v254
        %v263 = vpack.c.b16 %v257, %v256
        %v264 = vpack.c.b16 %v259, %v258
        %v265 = vpack.c.b16 %v261, %v260
        %v270 = vunpack.c.l.b16 %v238
        %v271 = vunpack.c.l.b16 %v239
        %v272 = vunpack.c.l.b16 %v240
        %v273 = vunpack.c.l.b16 %v241
        %v274 = vpack.c.b16 %v271, %v270
        %v275 = vpack.c.b16 %v273, %v272
        %vm277 = vcmask 220160
        %v279 = vsel %vm277, %v262, 0
        %v282 = vsel %vm277, %v263, 0
        %v285 = vsel %vm277, %v264, 0
        %v288 = vsel %vm277, %v265, 0
        %vm290 = vcmask 1044480
        %vm291 = vcmask 1045504
        %v292 = vsel %vm290, 4294967295, 65535
        %v293 = vsel %vm291, %v292, 0
        %v295 = vand.u32 %v275, %v293
        %297 = vmatpush.bf16.msra.mxu0 0
        %298 = vmatpush.bf16.msra.mxu0 0
        %299 = vmatpush.bf16.msra.mxu0 0
        %300 = vmatpush.bf16.msra.mxu0 0
        %301 = vmatpush.bf16.msra.mxu0 0
        %302 = vmatpush.bf16.msra.mxu0 0
        %303 = vmatpush.bf16.msra.mxu0 %v295
        %304 = vmatpush.bf16.msra.mxu0 %v274
        %305 = vmatmul.bf16.gmra.mxu0 %v279
        %v306 = vpop.f32.mrf.mxu0
        %v307 = vadd.f32 %v244, %v306
        %v308 = vpop.f32.mrf.mxu0
        %v309 = vadd.f32 %v244, %v308
        %310 = vmatmul.bf16.gmra.mxu0 %v282
        %v311 = vpop.f32.mrf.mxu0
        %v312 = vadd.f32 %v244, %v311
        %v313 = vpop.f32.mrf.mxu0
        %v314 = vadd.f32 %v244, %v313
        %315 = vmatmul.bf16.gmra.mxu0 %v285
        %v316 = vpop.f32.mrf.mxu0
        %v317 = vadd.f32 %v244, %v316
        %v318 = vpop.f32.mrf.mxu0
        %v319 = vadd.f32 %v244, %v318
        %320 = vmatmul.bf16.gmra.mxu0 %v288
        %v321 = vpop.f32.mrf.mxu0
        %v322 = vadd.f32 %v244, %v321
        %v323 = vpop.f32.mrf.mxu0
        %v324 = vadd.f32 %v244, %v323
        %325 = vdwg.mxu0
        %v326 = vmax.f32 %v307, 0.0
        %v327 = vmax.f32 %v309, 0.0
        %v328 = vmax.f32 %v312, 0.0
        %v329 = vmax.f32 %v314, 0.0
        %v330 = vmax.f32 %v317, 0.0
        %v331 = vmax.f32 %v319, 0.0
        %v332 = vmax.f32 %v322, 0.0
        %v333 = vmax.f32 %v324, 0.0
        %v334 = vpack.c.bf16 %v326, %v326
        %v335 = vpack.c.bf16 %v327, %v327
        %v336 = vpack.c.bf16 %v328, %v328
        %v337 = vpack.c.bf16 %v329, %v329
        %v338 = vpack.c.bf16 %v330, %v330
        %v339 = vpack.c.bf16 %v331, %v331
        %v340 = vpack.c.bf16 %v332, %v332
        %v341 = vpack.c.bf16 %v333, %v333
        %vm342 = vcmask 519168
        %343 = vst.msk [vmem:[%s226] sm:$0xf] %vm342, %v334
        %344 = vst.msk [vmem:[%s226 + $0x4] sm:$0xf] %vm342, %v335
        %345 = vst.msk [vmem:[%s226 + $0x8] sm:$0xf] %vm342, %v336
        %346 = vst.msk [vmem:[%s226 + $0xc] sm:$0xf] %vm342, %v337
        %347 = vst.msk [vmem:[%s226 + $0x10] sm:$0xf] %vm342, %v338
        %348 = vst.msk [vmem:[%s226 + $0x14] sm:$0xf] %vm342, %v339
        %349 = vst.msk [vmem:[%s226 + $0x18] sm:$0xf] %vm342, %v340
        %350 = vst.msk [vmem:[%s226 + $0x1c] sm:$0xf] %vm342, %v341
        %s351 = sand.u32 %s113, 1
        %s352 = scalar_lea.sflag [#allocation4], %s351
        %s353 = sand.u32 %s113, 1
        %s354 = smul.addr %s353, 32
        %s355 = scalar_lea.vmem [#allocation7], %s354
        // Predicated region
        $region41: #{tpu_custom_call.1} parent=31 // pred_check
          %p356 = pneg %p123
        $region42: #{tpu_custom_call.1} parent=31 // pred_check_branch
          %358 = sbr.rel (%p356) target = $region44
        $region43: #{tpu_custom_call.1} parent=31 // pred_region
          %s359 = smul.u32 4, %s26
          %361 = vsyncadd %s352, 0
          %s362 = smul.addr %s359, 2
          %s363 = smul.addr %s25, 32
          %s364 = sadd.s32 %s362, %s363
          %s365 = smul.addr %s364, 4
          %s366 = scalar_lea.hbm %s3, %s365
          %s367 = sshll.u32 %s355, 4
          %s368 = int_to_ptr.vmem [resolvable:$true] %s367
          %s369 = sshll.u32 %s366, 4
          %s370 = int_to_ptr.hbm [resolvable:$true] %s369
          %375 = dma.vmem_to_hbm [thread:$0]  %s368, 512, %s370, %s352, 64, 64, 4
        $region44: #{tpu_custom_call.1} parent=31 // pred_fallthru
          _
      $region32: #{tpu_custom_call.1} parent=5 // pred_fallthru
        _
      %p376 = scmp.le.s32.totalorder 2, %s16
      // Predicated region
      $region45: #{tpu_custom_call.1} parent=5 // pred_check
        %p377 = pneg %p376
      $region46: #{tpu_custom_call.1} parent=5 // pred_check_branch
        %379 = sbr.rel (%p377) target = $region48
      $region47: #{tpu_custom_call.1} parent=5 // pred_region
        %s380 = ssub.s32 %s16, 2
        // Predicated region
        $region49: #{tpu_custom_call.1} parent=47 // pred_check
          %p381 = pneg %p129
        $region50: #{tpu_custom_call.1} parent=47 // pred_check_branch
          %383 = sbr.rel (%p381) target = $region52
        $region51: #{tpu_custom_call.1} parent=47 // pred_region
          %s384 = sand.u32 %s114, 1
          %s385 = scalar_lea.sflag [#allocation4], %s384
          %s386 = sand.u32 %s114, 1
          %s387 = smul.addr %s386, 32
          %s388 = scalar_lea.vmem [#allocation7], %s387
          %390 = dma.done %s385, 512
        $region52: #{tpu_custom_call.1} parent=47 // pred_fallthru
          _
      $region48: #{tpu_custom_call.1} parent=5 // pred_fallthru
        _
    $region6: #{tpu_custom_call.1} parent=1 // loop_footer
      %s20 = sadd.s32 1, %s16
    $region7: #{tpu_custom_call.1} parent=1 // loop_footer_branch
      %15 = sbr.rel target = $region3
    $region8: #{tpu_custom_call.1} parent=1 // loop_exit
      _
    %391 = vsyncpa [#allocation3], 1
    %s392 = scalar_lea.sflag [#allocation3], 1
    %393 = vsyncpa %s392, 1
    %394 = vsyncpa [#allocation6], 1
    %395 = vsyncpa [#allocation4], 1
    %s396 = scalar_lea.sflag [#allocation4], 1
    %397 = vsyncpa %s396, 1

</llo_original>
